<compile_context>
chip_gen: v7x
topology: tpu7x:2x2x1
jax: 0.10.0
libtpu: 0.0.40
codegen_flags: <defaults>
</compile_context>

<pallas_src>
import functools
import math

import jax
import jax.numpy as jnp
from jax.experimental import pallas as pl
from jax.experimental.pallas import tpu as pltpu


def _hoarnn_kernel(x_ref, h_ref,
                   m_exp_ref, b_exp_ref,
                   m_lx_ref, b_lx_ref,
                   a_lh_ref, m_ly_ref,
                   y_ref, h_new_ref,
                   *, c, k_state):
    x = x_ref[...]
    h = h_ref[...]

    # expand_input: tanh(x @ Wexp^T + b)   (f32 accumulation on the MXU)
    xe = jnp.tanh(
        jnp.dot(x.astype(m_exp_ref.dtype), m_exp_ref[...],
                preferred_element_type=jnp.float32)
        + b_exp_ref[...].astype(jnp.float32))

    # Fused Lx projection: one (tb, 2*k_state) matmul, sliced into gate | lin.
    lx = (jnp.dot(xe.astype(m_lx_ref.dtype), m_lx_ref[...],
                  preferred_element_type=jnp.float32)
          + b_lx_ref[...].astype(jnp.float32))
    lh = jnp.dot(h.astype(a_lh_ref.dtype), a_lh_ref[...],
                 preferred_element_type=jnp.float32)

    lx_gate = lx[:, :k_state]
    lx_lin = lx[:, k_state:]

    h32 = h.astype(jnp.float32)
    z = jax.nn.sigmoid(lx_gate + lh)
    # h_new = h + dt*step_size/meandt * (z*tanh(lin+lh) - h); scalars folded in c.
    h_new = h32 + c * (z * jnp.tanh(lx_lin + lh) - h32)

    # Ly: Linear(k_state -> k_out, bias=False)
    y = jnp.dot(h_new.astype(m_ly_ref.dtype), m_ly_ref[...],
                preferred_element_type=jnp.float32)

    h_new_ref[...] = h_new.astype(h_new_ref.dtype)
    y_ref[...] = y.astype(y_ref.dtype)


def prepare_hoarnn_params(params, *, gamma, mxu_dtype=None):
    """Hoist per-step parameter glue out of the recurrent loop (call ONCE).

    Pre-transposes all weights so the kernel does plain `x @ M + b`, fuses the
    Lx gate/lin projections into a single (k_state, 2*k_state) matrix and
    materializes the antisymmetric Lh operator (W - W^T - gamma*I)^T.
    """
    w_exp, b_exp, w_lx, b_lx, w_lh, w_ly = (
        params["w_exp"], params["b_exp"], params["w_lx"], params["b_lx"],
        params["w_lh"], params["w_ly"])
    k_state = w_lh.shape[0]
    a_eff = w_lh - w_lh.T - gamma * jnp.eye(k_state, dtype=w_lh.dtype)
    prepared = {
        "m_exp": w_exp.T,                       # (k_in, k_state)
        "b_exp": b_exp.reshape(1, k_state),
        "m_lx": w_lx.T,                         # (k_state, 2*k_state)  gate|lin fused
        "b_lx": b_lx.reshape(1, 2 * k_state),
        "a_lh": a_eff.T,                        # (k_state, k_state)
        "m_ly": w_ly.T,                         # (k_state, k_out)
    }
    if mxu_dtype is not None:
        # Halves resident weight footprint / DMA bytes, doubles MXU rate on
        # v6e/v7x. Accumulation and elementwise tail remain f32 in the kernel.
        for k in ("m_exp", "m_lx", "a_lh", "m_ly"):
            prepared[k] = prepared[k].astype(mxu_dtype)
    return prepared


def hoarnn_cell_forward(x, state, prepared, *, dt, step_size, meandt,
                        block_b=256):
    """Runs one HOARNNCell step. Returns (y_new, state_new)."""
    B, k_in = x.shape
    _, k_state = state.shape
    m_exp, b_exp = prepared["m_exp"], prepared["b_exp"]
    m_lx, b_lx = prepared["m_lx"], prepared["b_lx"]
    a_lh, m_ly = prepared["a_lh"], prepared["m_ly"]
    k_out = m_ly.shape[1]

    # ---- batch tiling (rows) -------------------------------------------------
    tb = block_b if B > block_b else B          # block_b is a multiple of 8
    bp = -(-B // tb) * tb                       # padded batch
    if bp != B:
        x_p = jnp.pad(x, ((0, bp - B), (0, 0)))
        h_p = jnp.pad(state, ((0, bp - B), (0, 0)))
    else:
        x_p, h_p = x, state

    c = float(dt) * float(step_size) / float(meandt)
    kernel = functools.partial(_hoarnn_kernel, c=c, k_state=k_state)

    row = lambda i: (i, 0)      # batch-tiled operands
    const = lambda i: (0, 0)    # weights stay resident in VMEM across the grid

    in_specs = [
        pl.BlockSpec((tb, k_in), row),                  # x
        pl.BlockSpec((tb, k_state), row),               # h
        pl.BlockSpec((k_in, k_state), const),           # m_exp
        pl.BlockSpec((1, k_state), const),              # b_exp
        pl.BlockSpec((k_state, 2 * k_state), const),    # m_lx (fused gate|lin)
        pl.BlockSpec((1, 2 * k_state), const),          # b_lx
        pl.BlockSpec((k_state, k_state), const),        # a_lh
        pl.BlockSpec((k_state, k_out), const),          # m_ly
    ]
    out_specs = (
        pl.BlockSpec((tb, k_out), row),                 # y
        pl.BlockSpec((tb, k_state), row),               # h_new
    )

    # ---- cost estimate & VMEM budget ----------------------------------------
    nbytes = lambda a: int(a.size) * jnp.dtype(a.dtype).itemsize
    flops = 2 * bp * (k_in * k_state + 3 * k_state * k_state + k_state * k_out)
    transc = 3 * bp * k_state
    bytes_accessed = (sum(nbytes(a) for a in
                          (x_p, h_p, m_exp, b_exp, m_lx, b_lx, a_lh, m_ly))
                      + bp * k_out * jnp.dtype(x.dtype).itemsize
                      + bp * k_state * jnp.dtype(state.dtype).itemsize)

    w_bytes = sum(nbytes(a) for a in (m_exp, b_exp, m_lx, b_lx, a_lh, m_ly))
    act_bytes = tb * (k_in + 2 * k_state + k_out) * jnp.dtype(x.dtype).itemsize
    # weights + double-buffered activation tiles, 2x margin, capped at v7x's
    # 64 MiB physical VMEM per TensorCore.
    vmem_limit = int(min(max((2 * w_bytes + 4 * act_bytes) * 2, 16 * 2**20),
                         64 * 2**20))

    y_p, h_new_p = pl.pallas_call(
        kernel,
        grid=(bp // tb,),
        in_specs=in_specs,
        out_specs=out_specs,
        out_shape=(
            jax.ShapeDtypeStruct((bp, k_out), x.dtype),
            jax.ShapeDtypeStruct((bp, k_state), state.dtype),
        ),
        # recurrent state writes back into its own buffer (useful under scan).
        input_output_aliases={1: 1},
        compiler_params=pltpu.CompilerParams(
            dimension_semantics=("parallel",),
            vmem_limit_bytes=vmem_limit,
        ),
        cost_estimate=pl.CostEstimate(
            flops=flops, transcendentals=transc, bytes_accessed=bytes_accessed),
    )(x_p, h_p, m_exp, b_exp, m_lx, b_lx, a_lh, m_ly)

    if bp != B:
        return y_p[:B], h_new_p[:B]
    return y_p, h_new_p


def _reference_forward(x, state, params, *, dt, step_size, meandt, gamma):
    """Pure-JAX replica of HOARNNCell.forward (Euler, dropout=0)."""
    k_state = state.shape[1]
    xe = jnp.tanh(x @ params["w_exp"].T + params["b_exp"])
    lx = xe @ params["w_lx"].T + params["b_lx"]
    a_eff = (params["w_lh"] - params["w_lh"].T
             - gamma * jnp.eye(k_state, dtype=x.dtype))
    lh = state @ a_eff.T
    lx_gate, lx_lin = lx[:, :k_state], lx[:, k_state:]
    z = jax.nn.sigmoid(lx_gate + lh)
    f = step_size * (z * jnp.tanh(lx_lin + lh) - state) / meandt
    state_new = state + dt * f
    y_new = state_new @ params["w_ly"].T
    return y_new, state_new


def _make_case(key, B, k_in, k_state, k_out):
    ks = jax.random.split(key, 8)
    stdv = 1.0 / math.sqrt(k_state)   # init_params: uniform(-stdv, stdv)
    u = lambda k, shape: jax.random.uniform(
        k, shape, minval=-stdv, maxval=stdv, dtype=jnp.float32)
    params = {
        "w_exp": u(ks[0], (k_state, k_in)),        # expand_input Linear weight
        "b_exp": u(ks[1], (k_state,)),             # expand_input Linear bias
        "w_lx": u(ks[2], (2 * k_state, k_state)),  # Lx weight
        "b_lx": u(ks[3], (2 * k_state,)),          # Lx bias
        "w_lh": u(ks[4], (k_state, k_state)),      # ASLinear weight (bias=False)
        "w_ly": u(ks[5], (k_out, k_state)),        # Ly weight (bias=False)
    }
    x = jax.random.normal(ks[6], (B, k_in), dtype=jnp.float32)
    state = jax.random.normal(ks[7], (B, k_state), dtype=jnp.float32)
    return params, x, state


if __name__ == "__main__":
    meandt, step_size, gamma = 1.0, 1.0, 0.01
    dt = meandt  # forward() default: dt = self.meandt

    key = jax.random.PRNGKey(0)
    k1, k2 = jax.random.split(key)

    # Case 1: small config consistent with the module's constructor.
    # Case 2: exercises the multi-tile batch grid + padding path.
    cases = [
        (k1, 2, 4, 32, 8, 256),     # (key, B, k_in, k_state, k_out, block_b)
        (k2, 300, 8, 64, 16, 128),
    ]

    for ck, B, k_in, k_state, k_out, block_b in cases:
        params, x, state = _make_case(ck, B, k_in, k_state, k_out)

        # Reference computed first (state buffer is aliased/donated in the call).
        y_ref, s_ref = _reference_forward(
            x, state, params, dt=dt, step_size=step_size, meandt=meandt,
            gamma=gamma)

        # Parameter glue hoisted out of the (hypothetical) timestep loop.
        prepared = prepare_hoarnn_params(params, gamma=gamma)

        y_new, state_new = hoarnn_cell_forward(
            x, state, prepared, dt=dt, step_size=step_size, meandt=meandt,
            block_b=block_b)
        jax.block_until_ready((y_new, state_new))

        assert jnp.allclose(y_new, y_ref, atol=1e-5, rtol=1e-5)
        assert jnp.allclose(state_new, s_ref, atol=1e-5, rtol=1e-5)

    print("KERNEL_OK")
</pallas_src>

<mosaic_0001>
module attributes {stable_mosaic.version = 11 : i64} {
  func.func @_hoarnn_kernel(%arg0: i32, %arg1: memref<2x4xf32, #tpu.memory_space<vmem>>, %arg2: memref<2x32xf32, #tpu.memory_space<vmem>>, %arg3: memref<4x32xf32, #tpu.memory_space<vmem>>, %arg4: memref<1x32xf32, #tpu.memory_space<vmem>>, %arg5: memref<32x64xf32, #tpu.memory_space<vmem>>, %arg6: memref<1x64xf32, #tpu.memory_space<vmem>>, %arg7: memref<32x32xf32, #tpu.memory_space<vmem>>, %arg8: memref<32x8xf32, #tpu.memory_space<vmem>>, %arg9: memref<2x8xf32, #tpu.memory_space<vmem>>, %arg10: memref<2x32xf32, #tpu.memory_space<vmem>>) attributes {dimension_semantics = [#tpu.dimension_semantics<parallel>], iteration_bounds = array<i64: 1>, scalar_prefetch = 0 : i64, scratch_operands = 0 : i64, tpu.core_type = #tpu.core_type<tc>, window_params = [{transform_indices = @transform_0, window_bounds = array<i64: 2, 4>}, {transform_indices = @transform_1, window_bounds = array<i64: 2, 32>}, {pipeline_mode = #tpu.pipeline_mode<synchronous>, transform_indices = @transform_2, window_bounds = array<i64: 4, 32>}, {pipeline_mode = #tpu.pipeline_mode<synchronous>, transform_indices = @transform_3, window_bounds = array<i64: 1, 32>}, {pipeline_mode = #tpu.pipeline_mode<synchronous>, transform_indices = @transform_4, window_bounds = array<i64: 32, 64>}, {pipeline_mode = #tpu.pipeline_mode<synchronous>, transform_indices = @transform_5, window_bounds = array<i64: 1, 64>}, {pipeline_mode = #tpu.pipeline_mode<synchronous>, transform_indices = @transform_6, window_bounds = array<i64: 32, 32>}, {pipeline_mode = #tpu.pipeline_mode<synchronous>, transform_indices = @transform_7, window_bounds = array<i64: 32, 8>}, {transform_indices = @transform_8, window_bounds = array<i64: 2, 8>}, {transform_indices = @transform_9, window_bounds = array<i64: 2, 32>}]} {
    %c0 = arith.constant 0 : index
    %c0_0 = arith.constant 0 : index
    %0 = vector.load %arg1[%c0, %c0_0] : memref<2x4xf32, #tpu.memory_space<vmem>>, vector<2x4xf32>
    %c0_1 = arith.constant 0 : index
    %c0_2 = arith.constant 0 : index
    %1 = vector.load %arg2[%c0_1, %c0_2] : memref<2x32xf32, #tpu.memory_space<vmem>>, vector<2x32xf32>
    %c0_3 = arith.constant 0 : index
    %c0_4 = arith.constant 0 : index
    %2 = vector.load %arg3[%c0_3, %c0_4] : memref<4x32xf32, #tpu.memory_space<vmem>>, vector<4x32xf32>
    %cst = arith.constant dense<0.000000e+00> : vector<2x32xf32>
    %3 = tpu.matmul %0, %2, %cst {dimension_numbers = #tpu.dot_dimension_numbers<[1], [0], [0], [1], [0, 0, 1, 1], [], []>} : vector<2x4xf32>, vector<4x32xf32>, vector<2x32xf32> -> vector<2x32xf32>
    %c0_5 = arith.constant 0 : index
    %c0_6 = arith.constant 0 : index
    %4 = vector.load %arg4[%c0_5, %c0_6] : memref<1x32xf32, #tpu.memory_space<vmem>>, vector<1x32xf32>
    %5 = vector.broadcast %4 : vector<1x32xf32> to vector<2x32xf32>
    %6 = arith.addf %3, %5 : vector<2x32xf32>
    %7 = math.tanh %6 : vector<2x32xf32>
    %c0_7 = arith.constant 0 : index
    %c0_8 = arith.constant 0 : index
    %8 = vector.load %arg5[%c0_7, %c0_8] : memref<32x64xf32, #tpu.memory_space<vmem>>, vector<32x64xf32>
    %cst_9 = arith.constant dense<0.000000e+00> : vector<2x64xf32>
    %9 = tpu.matmul %7, %8, %cst_9 {dimension_numbers = #tpu.dot_dimension_numbers<[1], [0], [0], [1], [0, 0, 1, 1], [], []>} : vector<2x32xf32>, vector<32x64xf32>, vector<2x64xf32> -> vector<2x64xf32>
    %c0_10 = arith.constant 0 : index
    %c0_11 = arith.constant 0 : index
    %10 = vector.load %arg6[%c0_10, %c0_11] : memref<1x64xf32, #tpu.memory_space<vmem>>, vector<1x64xf32>
    %11 = vector.broadcast %10 : vector<1x64xf32> to vector<2x64xf32>
    %12 = arith.addf %9, %11 : vector<2x64xf32>
    %c0_12 = arith.constant 0 : index
    %c0_13 = arith.constant 0 : index
    %13 = vector.load %arg7[%c0_12, %c0_13] : memref<32x32xf32, #tpu.memory_space<vmem>>, vector<32x32xf32>
    %cst_14 = arith.constant dense<0.000000e+00> : vector<2x32xf32>
    %14 = tpu.matmul %1, %13, %cst_14 {dimension_numbers = #tpu.dot_dimension_numbers<[1], [0], [0], [1], [0, 0, 1, 1], [], []>} : vector<2x32xf32>, vector<32x32xf32>, vector<2x32xf32> -> vector<2x32xf32>
    %15 = vector.extract_strided_slice %12 {offsets = [0, 0], sizes = [2, 32], strides = [1, 1]} : vector<2x64xf32> to vector<2x32xf32>
    %16 = vector.extract_strided_slice %12 {offsets = [0, 32], sizes = [2, 32], strides = [1, 1]} : vector<2x64xf32> to vector<2x32xf32>
    %17 = arith.addf %15, %14 : vector<2x32xf32>
    %18 = arith.negf %17 : vector<2x32xf32>
    %19 = math.exp %18 : vector<2x32xf32>
    %cst_15 = arith.constant 1.000000e+00 : f32
    %20 = vector.broadcast %cst_15 : f32 to vector<2x32xf32>
    %21 = arith.addf %20, %19 : vector<2x32xf32>
    %22 = arith.divf %20, %21 : vector<2x32xf32>
    %23 = arith.addf %16, %14 : vector<2x32xf32>
    %24 = math.tanh %23 : vector<2x32xf32>
    %25 = arith.mulf %22, %24 : vector<2x32xf32>
    %26 = arith.subf %25, %1 : vector<2x32xf32>
    %cst_16 = arith.constant 1.000000e+00 : f32
    %27 = vector.broadcast %cst_16 : f32 to vector<2x32xf32>
    %28 = arith.mulf %27, %26 : vector<2x32xf32>
    %29 = arith.addf %1, %28 : vector<2x32xf32>
    %c0_17 = arith.constant 0 : index
    %c0_18 = arith.constant 0 : index
    %30 = vector.load %arg8[%c0_17, %c0_18] : memref<32x8xf32, #tpu.memory_space<vmem>>, vector<32x8xf32>
    %cst_19 = arith.constant dense<0.000000e+00> : vector<2x8xf32>
    %31 = tpu.matmul %29, %30, %cst_19 {dimension_numbers = #tpu.dot_dimension_numbers<[1], [0], [0], [1], [0, 0, 1, 1], [], []>} : vector<2x32xf32>, vector<32x8xf32>, vector<2x8xf32> -> vector<2x8xf32>
    %c0_20 = arith.constant 0 : index
    %c0_21 = arith.constant 0 : index
    %32 = vector.load %arg10[%c0_20, %c0_21] : memref<2x32xf32, #tpu.memory_space<vmem>>, vector<2x32xf32>
    tpu.vector_store %arg10[%c0_20, %c0_21], %29 {strides = array<i32>} : memref<2x32xf32, #tpu.memory_space<vmem>>, vector<2x32xf32>,
    %c0_22 = arith.constant 0 : index
    %c0_23 = arith.constant 0 : index
    %33 = vector.load %arg9[%c0_22, %c0_23] : memref<2x8xf32, #tpu.memory_space<vmem>>, vector<2x8xf32>
    tpu.vector_store %arg9[%c0_22, %c0_23], %31 {strides = array<i32>} : memref<2x8xf32, #tpu.memory_space<vmem>>, vector<2x8xf32>,
    return
  }
  func.func @transform_0(%arg0: i32) -> (i32, i32) {
    %c0_i32 = arith.constant 0 : i32
    %c0_i32_0 = arith.constant 0 : i32
    return %arg0, %c0_i32 : i32, i32
  }
  func.func @transform_1(%arg0: i32) -> (i32, i32) {
    %c0_i32 = arith.constant 0 : i32
    %c0_i32_0 = arith.constant 0 : i32
    return %arg0, %c0_i32 : i32, i32
  }
  func.func @transform_2(%arg0: i32) -> (i32, i32) {
    %c0_i32 = arith.constant 0 : i32
    %c0_i32_0 = arith.constant 0 : i32
    %c0_i32_1 = arith.constant 0 : i32
    return %c0_i32, %c0_i32_0 : i32, i32
  }
  func.func @transform_3(%arg0: i32) -> (i32, i32) {
    %c0_i32 = arith.constant 0 : i32
    %c0_i32_0 = arith.constant 0 : i32
    %c0_i32_1 = arith.constant 0 : i32
    return %c0_i32, %c0_i32_0 : i32, i32
  }
  func.func @transform_4(%arg0: i32) -> (i32, i32) {
    %c0_i32 = arith.constant 0 : i32
    %c0_i32_0 = arith.constant 0 : i32
    %c0_i32_1 = arith.constant 0 : i32
    return %c0_i32, %c0_i32_0 : i32, i32
  }
  func.func @transform_5(%arg0: i32) -> (i32, i32) {
    %c0_i32 = arith.constant 0 : i32
    %c0_i32_0 = arith.constant 0 : i32
    %c0_i32_1 = arith.constant 0 : i32
    return %c0_i32, %c0_i32_0 : i32, i32
  }
  func.func @transform_6(%arg0: i32) -> (i32, i32) {
    %c0_i32 = arith.constant 0 : i32
    %c0_i32_0 = arith.constant 0 : i32
    %c0_i32_1 = arith.constant 0 : i32
    return %c0_i32, %c0_i32_0 : i32, i32
  }
  func.func @transform_7(%arg0: i32) -> (i32, i32) {
    %c0_i32 = arith.constant 0 : i32
    %c0_i32_0 = arith.constant 0 : i32
    %c0_i32_1 = arith.constant 0 : i32
    return %c0_i32, %c0_i32_0 : i32, i32
  }
  func.func @transform_8(%arg0: i32) -> (i32, i32) {
    %c0_i32 = arith.constant 0 : i32
    %c0_i32_0 = arith.constant 0 : i32
    return %arg0, %c0_i32 : i32, i32
  }
  func.func @transform_9(%arg0: i32) -> (i32, i32) {
    %c0_i32 = arith.constant 0 : i32
    %c0_i32_0 = arith.constant 0 : i32
    return %arg0, %c0_i32 : i32, i32
  }
}

</mosaic_0001>

<llo_original>
// kernel: tpu_custom_call.1
$region0: #{tpu_custom_call.1}
  #allocation0 [shape = 'u32[]', space=smem, size = 0x4, offset = 0x4, fixed_abs, tag = 'smem constant byte address 0x4 - core index']
  #allocation1 [shape = 'u32[144,128]{1,0:T(1,128)}', space=vmem, size = 0x12000, scoped, tag = 'internal scratch']
  %s0 = inlined_call_operand.vmem [shape: f32[2,4], index: 0, kind: input, shape index: {}]
  %s1 = inlined_call_operand.hbm [shape: f32[2,32], index: 1, kind: input, shape index: {}, may-alias: {1,9}]
  %s2 = inlined_call_operand.vmem [shape: f32[4,32], index: 2, kind: input, shape index: {}]
  %s3 = inlined_call_operand.vmem [shape: f32[1,32], index: 3, kind: input, shape index: {}]
  %s4 = inlined_call_operand.vmem [shape: f32[32,64], index: 4, kind: input, shape index: {}]
  %s5 = inlined_call_operand.vmem [shape: f32[1,64], index: 5, kind: input, shape index: {}]
  %s6 = inlined_call_operand.hbm [shape: f32[32,32], index: 6, kind: input, shape index: {}]
  %s7 = inlined_call_operand.vmem [shape: f32[32,8], index: 7, kind: input, shape index: {}]
  %s8 = inlined_call_operand.hbm [shape: f32[2,8], index: 8, kind: output, shape index: {0}]
  %s9 = inlined_call_operand.hbm [shape: f32[2,32], index: 9, kind: output, shape index: {1}, may-alias: {1,9}]
  %10 = xla_tuple %s8, %s9
  %s11 = sld [smem:[#allocation0]]
  $region58: #{tpu_custom_call.1} parent=0
    _
  %s13 = ssub.s32 1, %s11
  %s14 = scalar_select 0, %s13, %s11
  $region1: #{tpu_custom_call.1} parent=0
    #allocation2 [shape = 'u8[1024]{0}', space=vmem, size = 0x400, scoped, tag = 'input window, operand 1, single buffered']
    #allocation3 [shape = 's32[1]{0}', space=sflag, size = 0x4, scoped, tag = 'scoped memory for tpu_custom_call.1']
    #allocation4 [shape = 's32[1]{0}', space=sflag, size = 0x4, scoped, tag = 'scoped memory for tpu_custom_call.1']
    #allocation5 [shape = 'u8[16384]{0}', space=vmem, size = 0x4000, scoped, tag = 'input window, operand 6, single buffered']
    #allocation6 [shape = 's32[1]{0}', space=sflag, size = 0x4, scoped, tag = 'scoped memory for tpu_custom_call.1']
    #allocation7 [shape = 'u8[1024]{0}', space=vmem, size = 0x400, scoped, tag = 'output window, operand 0, single buffered']
    #allocation8 [shape = 'u8[1024]{0}', space=vmem, size = 0x400, scoped, tag = 'output window, operand 1, single buffered']
    #allocation9 [shape = 's32[1]{0}', space=sflag, size = 0x4, scoped, tag = 'scoped memory for tpu_custom_call.1']
    %15 = vsyncpa [#allocation3], 0
    %16 = vsyncpa [#allocation6], 0
    %17 = vsyncpa [#allocation4], 0
    %18 = vsyncpa [#allocation9], 0
    // Predicated region
    $region2: #{tpu_custom_call.1} parent=1 // pred_check
      _
    $region3: #{tpu_custom_call.1} parent=1 // pred_check_branch
      %20 = sbr.rel (0) target = $region5
    $region4: #{tpu_custom_call.1} parent=1 // pred_region
      _
    $region5: #{tpu_custom_call.1} parent=1 // pred_fallthru
      _
    // Predicated region
    $region6: #{tpu_custom_call.1} parent=1 // pred_check
      _
    $region7: #{tpu_custom_call.1} parent=1 // pred_check_branch
      %22 = sbr.rel (0) target = $region9
    $region8: #{tpu_custom_call.1} parent=1 // pred_region
      %s24 = ssub.s32 32, 32
      %25 = vsyncadd [#allocation3], %s24
      %s27 = sshll.u32 [#allocation2], 4
      %s28 = int_to_ptr.vmem [resolvable:$true] %s27
      %30 = dma.hbm_to_vmem [thread:$0]  %s1, 32, %s28, [#allocation3]
    $region9: #{tpu_custom_call.1} parent=1 // pred_fallthru
      _
    // Predicated region
    $region10: #{tpu_custom_call.1} parent=1 // pred_check
      _
    $region11: #{tpu_custom_call.1} parent=1 // pred_check_branch
      %32 = sbr.rel (0) target = $region13
    $region12: #{tpu_custom_call.1} parent=1 // pred_region
      _
    $region13: #{tpu_custom_call.1} parent=1 // pred_fallthru
      _
    // Predicated region
    $region14: #{tpu_custom_call.1} parent=1 // pred_check
      _
    $region15: #{tpu_custom_call.1} parent=1 // pred_check_branch
      %34 = sbr.rel (0) target = $region17
    $region16: #{tpu_custom_call.1} parent=1 // pred_region
      _
    $region17: #{tpu_custom_call.1} parent=1 // pred_fallthru
      _
    // Predicated region
    $region18: #{tpu_custom_call.1} parent=1 // pred_check
      _
    $region19: #{tpu_custom_call.1} parent=1 // pred_check_branch
      %36 = sbr.rel (0) target = $region21
    $region20: #{tpu_custom_call.1} parent=1 // pred_region
      _
    $region21: #{tpu_custom_call.1} parent=1 // pred_fallthru
      _
    // Predicated region
    $region22: #{tpu_custom_call.1} parent=1 // pred_check
      _
    $region23: #{tpu_custom_call.1} parent=1 // pred_check_branch
      %38 = sbr.rel (0) target = $region25
    $region24: #{tpu_custom_call.1} parent=1 // pred_region
      _
    $region25: #{tpu_custom_call.1} parent=1 // pred_fallthru
      _
    // Predicated region
    $region26: #{tpu_custom_call.1} parent=1 // pred_check
      _
    $region27: #{tpu_custom_call.1} parent=1 // pred_check_branch
      %40 = sbr.rel (0) target = $region29
    $region28: #{tpu_custom_call.1} parent=1 // pred_region
      %s42 = ssub.s32 512, 512
      %43 = vsyncadd [#allocation6], %s42
      %s44 = sshll.u32 [#allocation5], 4
      %s45 = int_to_ptr.vmem [resolvable:$true] %s44
      %50 = dma.hbm_to_vmem [thread:$0]  %s6, 512, %s45, [#allocation6], 128, 128, 8
    $region29: #{tpu_custom_call.1} parent=1 // pred_fallthru
      _
    // Predicated region
    $region30: #{tpu_custom_call.1} parent=1 // pred_check
      _
    $region31: #{tpu_custom_call.1} parent=1 // pred_check_branch
      %52 = sbr.rel (0) target = $region33
    $region32: #{tpu_custom_call.1} parent=1 // pred_region
      _
    $region33: #{tpu_custom_call.1} parent=1 // pred_fallthru
      _
    // Predicated region
    $region34: #{tpu_custom_call.1} parent=1 // pred_check
      _
    $region35: #{tpu_custom_call.1} parent=1 // pred_check_branch
      %54 = sbr.rel (0) target = $region37
    $region36: #{tpu_custom_call.1} parent=1 // pred_region
      %55 = dma.done [#allocation3], 32
    $region37: #{tpu_custom_call.1} parent=1 // pred_fallthru
      _
    // Predicated region
    $region38: #{tpu_custom_call.1} parent=1 // pred_check
      _
    $region39: #{tpu_custom_call.1} parent=1 // pred_check_branch
      %57 = sbr.rel (0) target = $region41
    $region40: #{tpu_custom_call.1} parent=1 // pred_region
      %58 = dma.done [#allocation6], 512
    $region41: #{tpu_custom_call.1} parent=1 // pred_fallthru
      _
    %v59 = vld [vmem:[%s0] sm:$0x3]
    %v60 = vld [vmem:[#allocation2] sm:$0x3]
    %v61 = vld [vmem:[%s2] sm:$0xf]
    %v62 = vld [vmem:[%s3] sm:$0x1]
    %v64 = vlaneseq
    %v65 = vshrl.u32 %v64, 7
    %v66 = vsub.s32 0, %v65
    %v67 = vrot.slane %v62, %v66
    %vm69 = vcmask 31744
    %v71 = vsel %vm69, %v59, 0
    %vm73 = vcmask 1043456
    %v75 = vsel %vm73, %v61, 0
    %77 = vmatprep.subr.mxu0 0.0
    %78 = vmatpush1.msra.mxu0 %v75
    %79 = vmatprep.subr.mxu0 0.0
    %80 = vmatpush1.msra.mxu0 0.0
    %81 = vmatprep.subr.mxu0 0.0
    %82 = vmatpush1.msra.mxu0 0.0
    %83 = vmatprep.subr.mxu0 0.0
    %84 = vmatpush1.msra.mxu0 0.0
    %85 = vmatprep.subr.mxu0 0.0
    %86 = vmatpush1.msra.mxu0 0.0
    %87 = vmatprep.subr.mxu0 0.0
    %88 = vmatpush1.msra.mxu0 0.0
    %89 = vmatprep.subr.mxu0 0.0
    %90 = vmatpush1.msra.mxu0 0.0
    %91 = vmatprep.subr.mxu0 0.0
    %92 = vmatpush1.msra.mxu0 0.0
    %93 = vmatprep.subr.mxu0 0.0
    %94 = vmatpush1.msra.mxu0 0.0
    %95 = vmatprep.subr.mxu0 0.0
    %96 = vmatpush1.msra.mxu0 0.0
    %97 = vmatprep.subr.mxu0 0.0
    %98 = vmatpush1.msra.mxu0 0.0
    %99 = vmatprep.subr.mxu0 0.0
    %100 = vmatpush1.msra.mxu0 0.0
    %101 = vmatprep.subr.mxu0 0.0
    %102 = vmatpush1.msra.mxu0 0.0
    %103 = vmatprep.subr.mxu0 0.0
    %104 = vmatpush1.msra.mxu0 0.0
    %105 = vmatprep.subr.mxu0 0.0
    %106 = vmatpush1.msra.mxu0 0.0
    %107 = vmatprep.subr.mxu0 0.0
    %108 = vmatpush1.msra.mxu0 0.0
    %109 = vmatprep.subr.mxu0 0.0
    %110 = vmatpush1.msra.mxu0 0.0
    %111 = vmatprep.subr.mxu0 0.0
    %112 = vmatpush1.msra.mxu0 0.0
    %113 = vmatprep.subr.mxu0 0.0
    %114 = vmatpush1.msra.mxu0 0.0
    %115 = vmatprep.subr.mxu0 0.0
    %116 = vmatpush1.msra.mxu0 0.0
    %117 = vmatprep.subr.mxu0 0.0
    %118 = vmatpush1.msra.mxu0 0.0
    %119 = vmatprep.subr.mxu0 0.0
    %120 = vmatpush1.msra.mxu0 0.0
    %121 = vmatprep.subr.mxu0 0.0
    %122 = vmatpush1.msra.mxu0 0.0
    %123 = vmatprep.subr.mxu0 0.0
    %124 = vmatpush1.msra.mxu0 0.0
    %125 = vmatprep.subr.mxu0 0.0
    %126 = vmatpush1.msra.mxu0 0.0
    %127 = vmatprep.subr.mxu0 0.0
    %128 = vmatpush1.msra.mxu0 0.0
    %129 = vmatprep.subr.mxu0 0.0
    %130 = vmatpush1.msra.mxu0 0.0
    %131 = vmatprep.subr.mxu0 0.0
    %132 = vmatpush1.msra.mxu0 0.0
    %133 = vmatprep.subr.mxu0 0.0
    %134 = vmatpush1.msra.mxu0 0.0
    %135 = vmatprep.subr.mxu0 0.0
    %136 = vmatpush1.msra.mxu0 0.0
    %137 = vmatprep.subr.mxu0 0.0
    %138 = vmatpush1.msra.mxu0 0.0
    %139 = vmatprep.subr.mxu0 0.0
    %140 = vmatpush1.msra.mxu0 0.0
    %141 = vmatprep.mubr.f32.mxu0 0.0
    %142 = vmatmul.mubr.f32.gmra.mrb[0].mxu0 %v71
    %v143 = vpop.f32.mrb[0].mxu0
    %v144 = vadd.f32 %v67, %v143
    %v145 = vpop.f32.mrb[0].mxu0
    %146 = vdwg.mxu0
    %v147 = vtanh.pop %v144
    %v148 = vld [vmem:[%s4] sm:$0xff]
    %v149 = vld [vmem:[%s4 + $0x8] sm:$0xff]
    %v150 = vld [vmem:[%s4 + $0x10] sm:$0xff]
    %v151 = vld [vmem:[%s4 + $0x18] sm:$0xff]
    %v152 = vld [vmem:[%s5] sm:$0x1]
    %v154 = vlaneseq
    %v155 = vshrl.u32 %v154, 7
    %v156 = vsub.s32 0, %v155
    %v157 = vrot.slane %v152, %v156
    %vm159 = vcmask 261120
    %v161 = vsel %vm159, %v147, 0
    %163 = vmatprep.subr.mxu0 0.0
    %164 = vmatpush1.msra.mxu0 %v148
    %165 = vmatprep.subr.mxu0 0.0
    %166 = vmatpush1.msra.mxu0 %v149
    %167 = vmatprep.subr.mxu0 0.0
    %168 = vmatpush1.msra.mxu0 %v150
    %169 = vmatprep.subr.mxu0 0.0
    %170 = vmatpush1.msra.mxu0 %v151
    %171 = vmatprep.subr.mxu0 0.0
    %172 = vmatpush1.msra.mxu0 0.0
    %173 = vmatprep.subr.mxu0 0.0
    %174 = vmatpush1.msra.mxu0 0.0
    %175 = vmatprep.subr.mxu0 0.0
    %176 = vmatpush1.msra.mxu0 0.0
    %177 = vmatprep.subr.mxu0 0.0
    %178 = vmatpush1.msra.mxu0 0.0
    %179 = vmatprep.subr.mxu0 0.0
    %180 = vmatpush1.msra.mxu0 0.0
    %181 = vmatprep.subr.mxu0 0.0
    %182 = vmatpush1.msra.mxu0 0.0
    %183 = vmatprep.subr.mxu0 0.0
    %184 = vmatpush1.msra.mxu0 0.0
    %185 = vmatprep.subr.mxu0 0.0
    %186 = vmatpush1.msra.mxu0 0.0
    %187 = vmatprep.subr.mxu0 0.0
    %188 = vmatpush1.msra.mxu0 0.0
    %189 = vmatprep.subr.mxu0 0.0
    %190 = vmatpush1.msra.mxu0 0.0
    %191 = vmatprep.subr.mxu0 0.0
    %192 = vmatpush1.msra.mxu0 0.0
    %193 = vmatprep.subr.mxu0 0.0
    %194 = vmatpush1.msra.mxu0 0.0
    %195 = vmatprep.subr.mxu0 0.0
    %196 = vmatpush1.msra.mxu0 0.0
    %197 = vmatprep.subr.mxu0 0.0
    %198 = vmatpush1.msra.mxu0 0.0
    %199 = vmatprep.subr.mxu0 0.0
    %200 = vmatpush1.msra.mxu0 0.0
    %201 = vmatprep.subr.mxu0 0.0
    %202 = vmatpush1.msra.mxu0 0.0
    %203 = vmatprep.subr.mxu0 0.0
    %204 = vmatpush1.msra.mxu0 0.0
    %205 = vmatprep.subr.mxu0 0.0
    %206 = vmatpush1.msra.mxu0 0.0
    %207 = vmatprep.subr.mxu0 0.0
    %208 = vmatpush1.msra.mxu0 0.0
    %209 = vmatprep.subr.mxu0 0.0
    %210 = vmatpush1.msra.mxu0 0.0
    %211 = vmatprep.subr.mxu0 0.0
    %212 = vmatpush1.msra.mxu0 0.0
    %213 = vmatprep.subr.mxu0 0.0
    %214 = vmatpush1.msra.mxu0 0.0
    %215 = vmatprep.subr.mxu0 0.0
    %216 = vmatpush1.msra.mxu0 0.0
    %217 = vmatprep.subr.mxu0 0.0
    %218 = vmatpush1.msra.mxu0 0.0
    %219 = vmatprep.subr.mxu0 0.0
    %220 = vmatpush1.msra.mxu0 0.0
    %221 = vmatprep.subr.mxu0 0.0
    %222 = vmatpush1.msra.mxu0 0.0
    %223 = vmatprep.subr.mxu0 0.0
    %224 = vmatpush1.msra.mxu0 0.0
    %225 = vmatprep.subr.mxu0 0.0
    %226 = vmatpush1.msra.mxu0 0.0
    %227 = vmatprep.mubr.f32.mxu0 0.0
    %228 = vmatmul.mubr.f32.gmra.mrb[0].mxu0 %v161
    %v229 = vpop.f32.mrb[0].mxu0
    %v230 = vadd.f32 %v157, %v229
    %v231 = vpop.f32.mrb[0].mxu0
    %232 = vdwg.mxu0
    %v233 = vld [vmem:[#allocation5] sm:$0xff]
    %v234 = vld [vmem:[#allocation5 + $0x8] sm:$0xff]
    %v235 = vld [vmem:[#allocation5 + $0x10] sm:$0xff]
    %v236 = vld [vmem:[#allocation5 + $0x18] sm:$0xff]
    %v238 = vsel %vm159, %v60, 0
    %240 = vmatprep.subr.mxu0 0.0
    %241 = vmatpush1.msra.mxu0 %v233
    %242 = vmatprep.subr.mxu0 0.0
    %243 = vmatpush1.msra.mxu0 %v234
    %244 = vmatprep.subr.mxu0 0.0
    %245 = vmatpush1.msra.mxu0 %v235
    %246 = vmatprep.subr.mxu0 0.0
    %247 = vmatpush1.msra.mxu0 %v236
    %248 = vmatprep.subr.mxu0 0.0
    %249 = vmatpush1.msra.mxu0 0.0
    %250 = vmatprep.subr.mxu0 0.0
    %251 = vmatpush1.msra.mxu0 0.0
    %252 = vmatprep.subr.mxu0 0.0
    %253 = vmatpush1.msra.mxu0 0.0
    %254 = vmatprep.subr.mxu0 0.0
    %255 = vmatpush1.msra.mxu0 0.0
    %256 = vmatprep.subr.mxu0 0.0
    %257 = vmatpush1.msra.mxu0 0.0
    %258 = vmatprep.subr.mxu0 0.0
    %259 = vmatpush1.msra.mxu0 0.0
    %260 = vmatprep.subr.mxu0 0.0
    %261 = vmatpush1.msra.mxu0 0.0
    %262 = vmatprep.subr.mxu0 0.0
    %263 = vmatpush1.msra.mxu0 0.0
    %264 = vmatprep.subr.mxu0 0.0
    %265 = vmatpush1.msra.mxu0 0.0
    %266 = vmatprep.subr.mxu0 0.0
    %267 = vmatpush1.msra.mxu0 0.0
    %268 = vmatprep.subr.mxu0 0.0
    %269 = vmatpush1.msra.mxu0 0.0
    %270 = vmatprep.subr.mxu0 0.0
    %271 = vmatpush1.msra.mxu0 0.0
    %272 = vmatprep.subr.mxu0 0.0
    %273 = vmatpush1.msra.mxu0 0.0
    %274 = vmatprep.subr.mxu0 0.0
    %275 = vmatpush1.msra.mxu0 0.0
    %276 = vmatprep.subr.mxu0 0.0
    %277 = vmatpush1.msra.mxu0 0.0
    %278 = vmatprep.subr.mxu0 0.0
    %279 = vmatpush1.msra.mxu0 0.0
    %280 = vmatprep.subr.mxu0 0.0
    %281 = vmatpush1.msra.mxu0 0.0
    %282 = vmatprep.subr.mxu0 0.0
    %283 = vmatpush1.msra.mxu0 0.0
    %284 = vmatprep.subr.mxu0 0.0
    %285 = vmatpush1.msra.mxu0 0.0
    %286 = vmatprep.subr.mxu0 0.0
    %287 = vmatpush1.msra.mxu0 0.0
    %288 = vmatprep.subr.mxu0 0.0
    %289 = vmatpush1.msra.mxu0 0.0
    %290 = vmatprep.subr.mxu0 0.0
    %291 = vmatpush1.msra.mxu0 0.0
    %292 = vmatprep.subr.mxu0 0.0
    %293 = vmatpush1.msra.mxu0 0.0
    %294 = vmatprep.subr.mxu0 0.0
    %295 = vmatpush1.msra.mxu0 0.0
    %296 = vmatprep.subr.mxu0 0.0
    %297 = vmatpush1.msra.mxu0 0.0
    %298 = vmatprep.subr.mxu0 0.0
    %299 = vmatpush1.msra.mxu0 0.0
    %300 = vmatprep.subr.mxu0 0.0
    %301 = vmatpush1.msra.mxu0 0.0
    %302 = vmatprep.subr.mxu0 0.0
    %303 = vmatpush1.msra.mxu0 0.0
    %304 = vmatprep.mubr.f32.mxu0 0.0
    %305 = vmatmul.mubr.f32.gmra.mrb[0].mxu0 %v238
    %v306 = vpop.f32.mrb[0].mxu0
    %v307 = vadd.f32 0.0, %v306
    %v308 = vpop.f32.mrb[0].mxu0
    %309 = vdwg.mxu0
    %v310 = vadd.f32 %v230, %v307
    %v311 = vxor.u32 %v310, 2147483648
    %v312 = vmul.f32 %v311, 1.442695
    %v313 = vpow.pop %v312
    %v314 = vadd.f32 %v313, 1.0
    %v315 = vrcp.pop %v314
    %v316 = vmul.f32 1.0, %v315
    %318 = vrot.lane.b32.xlu0 %v307, 32
    %v319 = vpop.permute.xlu0 %318
    %v321 = vadd.f32 %v230, %v319
    %v322 = vtanh.pop %v321
    %324 = vrot.lane.b32.xlu0 %v322, 96
    %v325 = vpop.permute.xlu0 %324
    %v327 = vmul.f32 %v316, %v325
    %v328 = vsub.f32 %v327, %v60
    %v329 = vadd.f32 %v60, %v328
    %v330 = vld [vmem:[%s7] sm:$0xff]
    %v331 = vld [vmem:[%s7 + $0x8] sm:$0xff]
    %v332 = vld [vmem:[%s7 + $0x10] sm:$0xff]
    %v333 = vld [vmem:[%s7 + $0x18] sm:$0xff]
    %v335 = vsel %vm159, %v329, 0
    %337 = vmatprep.subr.mxu0 0.0
    %338 = vmatpush1.msra.mxu0 %v330
    %339 = vmatprep.subr.mxu0 0.0
    %340 = vmatpush1.msra.mxu0 %v331
    %341 = vmatprep.subr.mxu0 0.0
    %342 = vmatpush1.msra.mxu0 %v332
    %343 = vmatprep.subr.mxu0 0.0
    %344 = vmatpush1.msra.mxu0 %v333
    %345 = vmatprep.subr.mxu0 0.0
    %346 = vmatpush1.msra.mxu0 0.0
    %347 = vmatprep.subr.mxu0 0.0
    %348 = vmatpush1.msra.mxu0 0.0
    %349 = vmatprep.subr.mxu0 0.0
    %350 = vmatpush1.msra.mxu0 0.0
    %351 = vmatprep.subr.mxu0 0.0
    %352 = vmatpush1.msra.mxu0 0.0
    %353 = vmatprep.subr.mxu0 0.0
    %354 = vmatpush1.msra.mxu0 0.0
    %355 = vmatprep.subr.mxu0 0.0
    %356 = vmatpush1.msra.mxu0 0.0
    %357 = vmatprep.subr.mxu0 0.0
    %358 = vmatpush1.msra.mxu0 0.0
    %359 = vmatprep.subr.mxu0 0.0
    %360 = vmatpush1.msra.mxu0 0.0
    %361 = vmatprep.subr.mxu0 0.0
    %362 = vmatpush1.msra.mxu0 0.0
    %363 = vmatprep.subr.mxu0 0.0
    %364 = vmatpush1.msra.mxu0 0.0
    %365 = vmatprep.subr.mxu0 0.0
    %366 = vmatpush1.msra.mxu0 0.0
    %367 = vmatprep.subr.mxu0 0.0
    %368 = vmatpush1.msra.mxu0 0.0
    %369 = vmatprep.subr.mxu0 0.0
    %370 = vmatpush1.msra.mxu0 0.0
    %371 = vmatprep.subr.mxu0 0.0
    %372 = vmatpush1.msra.mxu0 0.0
    %373 = vmatprep.subr.mxu0 0.0
    %374 = vmatpush1.msra.mxu0 0.0
    %375 = vmatprep.subr.mxu0 0.0
    %376 = vmatpush1.msra.mxu0 0.0
    %377 = vmatprep.subr.mxu0 0.0
    %378 = vmatpush1.msra.mxu0 0.0
    %379 = vmatprep.subr.mxu0 0.0
    %380 = vmatpush1.msra.mxu0 0.0
    %381 = vmatprep.subr.mxu0 0.0
    %382 = vmatpush1.msra.mxu0 0.0
    %383 = vmatprep.subr.mxu0 0.0
    %384 = vmatpush1.msra.mxu0 0.0
    %385 = vmatprep.subr.mxu0 0.0
    %386 = vmatpush1.msra.mxu0 0.0
    %387 = vmatprep.subr.mxu0 0.0
    %388 = vmatpush1.msra.mxu0 0.0
    %389 = vmatprep.subr.mxu0 0.0
    %390 = vmatpush1.msra.mxu0 0.0
    %391 = vmatprep.subr.mxu0 0.0
    %392 = vmatpush1.msra.mxu0 0.0
    %393 = vmatprep.subr.mxu0 0.0
    %394 = vmatpush1.msra.mxu0 0.0
    %395 = vmatprep.subr.mxu0 0.0
    %396 = vmatpush1.msra.mxu0 0.0
    %397 = vmatprep.subr.mxu0 0.0
    %398 = vmatpush1.msra.mxu0 0.0
    %399 = vmatprep.subr.mxu0 0.0
    %400 = vmatpush1.msra.mxu0 0.0
    %401 = vmatprep.mubr.f32.mxu0 0.0
    %402 = vmatmul.mubr.f32.gmra.mrb[0].mxu0 %v335
    %v403 = vpop.f32.mrb[0].mxu0
    %v404 = vadd.f32 0.0, %v403
    %v405 = vpop.f32.mrb[0].mxu0
    %406 = vdwg.mxu0
    %vm407 = vcmask 254976
    %408 = vst.msk [vmem:[#allocation8] sm:$0x3] %vm407, %v329
    %vm409 = vcmask 58368
    %410 = vst.msk [vmem:[#allocation7] sm:$0x3] %vm409, %v404
    // Predicated region
    $region42: #{tpu_custom_call.1} parent=1 // pred_check
      _
    $region43: #{tpu_custom_call.1} parent=1 // pred_check_branch
      %412 = sbr.rel (0) target = $region45
    $region44: #{tpu_custom_call.1} parent=1 // pred_region
      %s414 = ssub.s32 32, 32
      %415 = vsyncadd [#allocation4], %s414
      %s417 = sshll.u32 [#allocation7], 4
      %s418 = int_to_ptr.vmem [resolvable:$true] %s417
      %420 = dma.vmem_to_hbm [thread:$0]  %s418, 32, %s8, [#allocation4]
    $region45: #{tpu_custom_call.1} parent=1 // pred_fallthru
      _
    // Predicated region
    $region46: #{tpu_custom_call.1} parent=1 // pred_check
      _
    $region47: #{tpu_custom_call.1} parent=1 // pred_check_branch
      %422 = sbr.rel (0) target = $region49
    $region48: #{tpu_custom_call.1} parent=1 // pred_region
      %s424 = ssub.s32 32, 32
      %425 = vsyncadd [#allocation9], %s424
      %s427 = sshll.u32 [#allocation8], 4
      %s428 = int_to_ptr.vmem [resolvable:$true] %s427
      %430 = dma.vmem_to_hbm [thread:$0]  %s428, 32, %s9, [#allocation9]
    $region49: #{tpu_custom_call.1} parent=1 // pred_fallthru
      _
    // Predicated region
    $region50: #{tpu_custom_call.1} parent=1 // pred_check
      _
    $region51: #{tpu_custom_call.1} parent=1 // pred_check_branch
      %432 = sbr.rel (0) target = $region53
    $region52: #{tpu_custom_call.1} parent=1 // pred_region
      %433 = dma.done [#allocation4], 32
    $region53: #{tpu_custom_call.1} parent=1 // pred_fallthru
      _
    // Predicated region
    $region54: #{tpu_custom_call.1} parent=1 // pred_check
      _
    $region55: #{tpu_custom_call.1} parent=1 // pred_check_branch
      %435 = sbr.rel (0) target = $region57
    $region56: #{tpu_custom_call.1} parent=1 // pred_region
      %436 = dma.done [#allocation9], 32
    $region57: #{tpu_custom_call.1} parent=1 // pred_fallthru
      _
    %437 = vsyncpa [#allocation3], 1
    %438 = vsyncpa [#allocation6], 1
    %439 = vsyncpa [#allocation4], 1
    %440 = vsyncpa [#allocation9], 1

</llo_original>
